<compile_context>
chip_gen: v7x
topology: tpu7x:2x2x1
jax: 0.10.0
libtpu: 0.0.40
codegen_flags: <defaults>
</compile_context>

<pallas_src>
import functools

import jax
import jax.numpy as jnp
from jax import lax
from jax.experimental import pallas as pl
from jax.experimental.pallas import tpu as pltpu

QUANT_BITS = 8
EPS = 1e-5
QMIN = float(-(2 ** (QUANT_BITS - 1)))   # -128
QMAX = float(2 ** (QUANT_BITS - 1) - 1)  # 127


def _round_up(a, b):
    return (a + b - 1) // b * b


# ---------------- pass 1: global min / max ----------------
def _minmax_kernel(x_ref, mn_ref, mx_ref, mn_acc, mx_acc):
    i = pl.program_id(0)

    @pl.when(i == 0)
    def _init():
        mn_acc[...] = jnp.full_like(mn_acc, jnp.inf)
        mx_acc[...] = jnp.full_like(mx_acc, -jnp.inf)

    x = x_ref[...].astype(jnp.float32)          # cast in-kernel (VPU), no HBM f32 copy
    mn_acc[...] = jnp.minimum(mn_acc[...], x)   # pure VPU steady state
    mx_acc[...] = jnp.maximum(mx_acc[...], x)

    @pl.when(i == pl.num_programs(0) - 1)
    def _fini():
        mn_ref[...] = jnp.min(mn_acc[...], keepdims=True)
        mx_ref[...] = jnp.max(mx_acc[...], keepdims=True)


# ---------------- pass 2: fake-quantize + layernorm + affine ----------------
def _qln_kernel(mn_ref, mx_ref, x_ref, w_ref, b_ref, o_ref, *, h):
    t_min = mn_ref[0, 0]
    t_max = mx_ref[0, 0]

    scale = (t_max - t_min) * (1.0 / (QMAX - QMIN))
    inv_scale = 1.0 / scale                       # single scalar divide per tile
    zero_point = QMIN - t_min * inv_scale

    x = x_ref[...].astype(jnp.float32)
    # fake-quantize: clamp(round(x/scale + zp)) -> dequantize
    q = jnp.clip(jnp.round(x * inv_scale + zero_point), QMIN, QMAX)
    xq = scale * (q - zero_point)

    inv_h = 1.0 / h
    mean = jnp.sum(xq, axis=-1, keepdims=True) * inv_h
    d = xq - mean                                 # reused for var and normalization
    var = jnp.sum(d * d, axis=-1, keepdims=True) * inv_h
    inv_std = lax.rsqrt(var + EPS)                # (tm, 1) only -> EUP nearly idle

    w = w_ref[...].astype(jnp.float32)
    b = b_ref[...].astype(jnp.float32)
    o_ref[...] = (d * inv_std * w + b).astype(o_ref.dtype)


def quantized_layer_norm(x, weight, bias, *, target_block_bytes=2 * 1024 * 1024):
    """x: [..., H]; weight/bias: [H]. Returns same shape/dtype as x."""
    orig_shape = x.shape
    H = orig_shape[-1]
    rows = x.size // H
    x2 = x.reshape(rows, H)

    # Row tile: ~2 MiB of f32 per block (memory-bound sweet spot), multiple of
    # 16 (bf16 sublane packing), never larger than the (padded) row count.
    # 2 MiB blocks double-buffered for in + out stay well inside the scoped
    # VMEM defaults on v5e/v6e/v7x.
    tm = max(16, (target_block_bytes // (H * 4)) // 16 * 16)
    tm = min(tm, _round_up(rows, 16))

    rows_p = _round_up(rows, tm)
    if rows_p != rows:
        # edge-replication keeps the global min/max unchanged; padded output
        # rows are sliced away below
        x2 = jnp.pad(x2, ((0, rows_p - rows), (0, 0)), mode="edge")

    n_steps = rows_p // tm
    itemsize = jnp.dtype(x.dtype).itemsize
    in_bytes = rows_p * H * itemsize

    cparams = pltpu.CompilerParams(
        dimension_semantics=("arbitrary",),
        vmem_limit_bytes=32 * 1024 * 1024,
    )

    # ---- pass 1: global min/max over the whole tensor ----
    mn, mx = pl.pallas_call(
        _minmax_kernel,
        out_shape=(
            jax.ShapeDtypeStruct((1, 1), jnp.float32),
            jax.ShapeDtypeStruct((1, 1), jnp.float32),
        ),
        grid=(n_steps,),
        in_specs=[pl.BlockSpec((tm, H), lambda i: (i, 0))],
        out_specs=(
            pl.BlockSpec((1, 1), lambda i: (0, 0)),
            pl.BlockSpec((1, 1), lambda i: (0, 0)),
        ),
        scratch_shapes=[
            pltpu.VMEM((tm, H), jnp.float32),
            pltpu.VMEM((tm, H), jnp.float32),
        ],
        compiler_params=cparams,
        cost_estimate=pl.CostEstimate(
            flops=2 * rows_p * H, transcendentals=0, bytes_accessed=in_bytes + 8
        ),
    )(x2)

    # ---- pass 2: fake-quant + layernorm + affine, row-tiled ----
    out2 = pl.pallas_call(
        functools.partial(_qln_kernel, h=H),
        out_shape=jax.ShapeDtypeStruct((rows_p, H), x.dtype),
        grid=(n_steps,),
        in_specs=[
            pl.BlockSpec(memory_space=pltpu.MemorySpace.SMEM),   # global min
            pl.BlockSpec(memory_space=pltpu.MemorySpace.SMEM),   # global max
            pl.BlockSpec((tm, H), lambda i: (i, 0)),             # x tile
            pl.BlockSpec((1, H), lambda i: (0, 0)),              # weight
            pl.BlockSpec((1, H), lambda i: (0, 0)),              # bias
        ],
        out_specs=pl.BlockSpec((tm, H), lambda i: (i, 0)),
        compiler_params=pltpu.CompilerParams(
            dimension_semantics=("parallel",),
            vmem_limit_bytes=32 * 1024 * 1024,
        ),
        cost_estimate=pl.CostEstimate(
            flops=10 * rows_p * H,
            transcendentals=rows_p,
            bytes_accessed=2 * in_bytes + 2 * H * 4 + 8,
        ),
    )(mn, mx, x2, weight.reshape(1, H), bias.reshape(1, H))

    if rows_p != rows:
        out2 = out2[:rows]
    return out2.reshape(orig_shape)


def _reference(x, weight, bias):
    """Pure-JAX replica of QuantizedLayerNorm.forward (bits=8)."""
    qmin, qmax = -128.0, 127.0
    t_min, t_max = jnp.min(x), jnp.max(x)
    scale = (t_max - t_min) / (qmax - qmin)
    zero_point = qmin - t_min / scale
    xq = scale * (jnp.clip(jnp.round(x / scale + zero_point), qmin, qmax) - zero_point)
    mean = jnp.mean(xq, axis=-1, keepdims=True)
    var = jnp.mean((xq - mean) ** 2, axis=-1, keepdims=True)
    normalized = (xq - mean) / jnp.sqrt(var + EPS)
    return normalized * weight + bias


if __name__ == "__main__":
    B, S, H = 2, 8, 32  # normalized_shape = (32,)
    key = jax.random.PRNGKey(0)
    x = jax.random.normal(key, (B, S, H), dtype=jnp.float32)

    # deterministic parameter init matching nn.Parameter(ones / zeros)
    weight = jnp.ones((H,), dtype=jnp.float32)
    bias = jnp.zeros((H,), dtype=jnp.float32)

    out = quantized_layer_norm(x, weight, bias)
    jax.block_until_ready(out)

    ref = _reference(x, weight, bias)
    assert out.shape == x.shape and out.dtype == x.dtype
    assert jnp.allclose(out, ref, atol=1e-4, rtol=1e-4), "mismatch vs reference"

    print("KERNEL_OK")
</pallas_src>

<mosaic_0001>
module attributes {stable_mosaic.version = 11 : i64} {
  func.func @_minmax_kernel(%arg0: i32, %arg1: memref<16x32xf32, #tpu.memory_space<vmem>>, %arg2: memref<1x1xf32, #tpu.memory_space<vmem>>, %arg3: memref<1x1xf32, #tpu.memory_space<vmem>>, %arg4: memref<16x32xf32, #tpu.memory_space<vmem>>, %arg5: memref<16x32xf32, #tpu.memory_space<vmem>>) attributes {dimension_semantics = [#tpu.dimension_semantics<arbitrary>], iteration_bounds = array<i64: 1>, scalar_prefetch = 0 : i64, scratch_operands = 2 : i64, tpu.core_type = #tpu.core_type<tc>, window_params = [{transform_indices = @transform_0, window_bounds = array<i64: 16, 32>}, {pipeline_mode = #tpu.pipeline_mode<synchronous>, transform_indices = @transform_1, window_bounds = array<i64: 1, 1>}, {pipeline_mode = #tpu.pipeline_mode<synchronous>, transform_indices = @transform_2, window_bounds = array<i64: 1, 1>}]} {
    %c0_i32 = arith.constant 0 : i32
    %0 = arith.cmpi eq, %arg0, %c0_i32 : i32
    %1 = arith.extui %0 : i1 to i32
    %c0_i32_0 = arith.constant 0 : i32
    %2 = arith.cmpi ne, %1, %c0_i32_0 : i32
    scf.if %2 {
      %cst = arith.constant 0x7F800000 : f32
      %13 = vector.broadcast %cst : f32 to vector<16x32xf32>
      %c0_12 = arith.constant 0 : index
      %c0_13 = arith.constant 0 : index
      %14 = vector.load %arg4[%c0_12, %c0_13] : memref<16x32xf32, #tpu.memory_space<vmem>>, vector<16x32xf32>
      tpu.vector_store %arg4[%c0_12, %c0_13], %13 {strides = array<i32>} : memref<16x32xf32, #tpu.memory_space<vmem>>, vector<16x32xf32>,
      %cst_14 = arith.constant 0xFF800000 : f32
      %15 = vector.broadcast %cst_14 : f32 to vector<16x32xf32>
      %c0_15 = arith.constant 0 : index
      %c0_16 = arith.constant 0 : index
      %16 = vector.load %arg5[%c0_15, %c0_16] : memref<16x32xf32, #tpu.memory_space<vmem>>, vector<16x32xf32>
      tpu.vector_store %arg5[%c0_15, %c0_16], %15 {strides = array<i32>} : memref<16x32xf32, #tpu.memory_space<vmem>>, vector<16x32xf32>,
    } else {
    }
    %c0 = arith.constant 0 : index
    %c0_1 = arith.constant 0 : index
    %3 = vector.load %arg1[%c0, %c0_1] : memref<16x32xf32, #tpu.memory_space<vmem>>, vector<16x32xf32>
    %c0_2 = arith.constant 0 : index
    %c0_3 = arith.constant 0 : index
    %4 = vector.load %arg4[%c0_2, %c0_3] : memref<16x32xf32, #tpu.memory_space<vmem>>, vector<16x32xf32>
    %5 = arith.minimumf %4, %3 : vector<16x32xf32>
    %c0_4 = arith.constant 0 : index
    %c0_5 = arith.constant 0 : index
    %6 = vector.load %arg4[%c0_4, %c0_5] : memref<16x32xf32, #tpu.memory_space<vmem>>, vector<16x32xf32>
    tpu.vector_store %arg4[%c0_4, %c0_5], %5 {strides = array<i32>} : memref<16x32xf32, #tpu.memory_space<vmem>>, vector<16x32xf32>,
    %c0_6 = arith.constant 0 : index
    %c0_7 = arith.constant 0 : index
    %7 = vector.load %arg5[%c0_6, %c0_7] : memref<16x32xf32, #tpu.memory_space<vmem>>, vector<16x32xf32>
    %8 = arith.maximumf %7, %3 : vector<16x32xf32>
    %c0_8 = arith.constant 0 : index
    %c0_9 = arith.constant 0 : index
    %9 = vector.load %arg5[%c0_8, %c0_9] : memref<16x32xf32, #tpu.memory_space<vmem>>, vector<16x32xf32>
    tpu.vector_store %arg5[%c0_8, %c0_9], %8 {strides = array<i32>} : memref<16x32xf32, #tpu.memory_space<vmem>>, vector<16x32xf32>,
    %c0_i32_10 = arith.constant 0 : i32
    %10 = arith.cmpi eq, %arg0, %c0_i32_10 : i32
    %11 = arith.extui %10 : i1 to i32
    %c0_i32_11 = arith.constant 0 : i32
    %12 = arith.cmpi ne, %11, %c0_i32_11 : i32
    scf.if %12 {
      %c0_12 = arith.constant 0 : index
      %c0_13 = arith.constant 0 : index
      %13 = vector.load %arg4[%c0_12, %c0_13] : memref<16x32xf32, #tpu.memory_space<vmem>>, vector<16x32xf32>
      %14 = vector.shape_cast %13 : vector<16x32xf32> to vector<1x16x32xf32>
      %cst = arith.constant dense<0x7F800000> : vector<1xf32>
      %15 = vector.multi_reduction <minimumf>, %14, %cst [1, 2] : vector<1x16x32xf32> to vector<1xf32>
      %16 = vector.shape_cast %15 : vector<1xf32> to vector<1x1x1xf32>
      %17 = vector.extract %16[0, 0, 0] : f32 from vector<1x1x1xf32>
      %18 = vector.broadcast %17 : f32 to vector<1x1xf32>
      %c0_14 = arith.constant 0 : index
      %c0_15 = arith.constant 0 : index
      %19 = vector.load %arg2[%c0_14, %c0_15] : memref<1x1xf32, #tpu.memory_space<vmem>>, vector<1x1xf32>
      tpu.vector_store %arg2[%c0_14, %c0_15], %18 {strides = array<i32>} : memref<1x1xf32, #tpu.memory_space<vmem>>, vector<1x1xf32>,
      %c0_16 = arith.constant 0 : index
      %c0_17 = arith.constant 0 : index
      %20 = vector.load %arg5[%c0_16, %c0_17] : memref<16x32xf32, #tpu.memory_space<vmem>>, vector<16x32xf32>
      %21 = vector.shape_cast %20 : vector<16x32xf32> to vector<1x16x32xf32>
      %cst_18 = arith.constant dense<0xFF800000> : vector<1xf32>
      %22 = vector.multi_reduction <maximumf>, %21, %cst_18 [1, 2] : vector<1x16x32xf32> to vector<1xf32>
      %23 = vector.shape_cast %22 : vector<1xf32> to vector<1x1x1xf32>
      %24 = vector.extract %23[0, 0, 0] : f32 from vector<1x1x1xf32>
      %25 = vector.broadcast %24 : f32 to vector<1x1xf32>
      %c0_19 = arith.constant 0 : index
      %c0_20 = arith.constant 0 : index
      %26 = vector.load %arg3[%c0_19, %c0_20] : memref<1x1xf32, #tpu.memory_space<vmem>>, vector<1x1xf32>
      tpu.vector_store %arg3[%c0_19, %c0_20], %25 {strides = array<i32>} : memref<1x1xf32, #tpu.memory_space<vmem>>, vector<1x1xf32>,
    } else {
    }
    return
  }
  func.func @transform_0(%arg0: i32) -> (i32, i32) {
    %c0_i32 = arith.constant 0 : i32
    %c0_i32_0 = arith.constant 0 : i32
    return %arg0, %c0_i32 : i32, i32
  }
  func.func @transform_1(%arg0: i32) -> (i32, i32) {
    %c0_i32 = arith.constant 0 : i32
    %c0_i32_0 = arith.constant 0 : i32
    %c0_i32_1 = arith.constant 0 : i32
    return %c0_i32, %c0_i32_0 : i32, i32
  }
  func.func @transform_2(%arg0: i32) -> (i32, i32) {
    %c0_i32 = arith.constant 0 : i32
    %c0_i32_0 = arith.constant 0 : i32
    %c0_i32_1 = arith.constant 0 : i32
    return %c0_i32, %c0_i32_0 : i32, i32
  }
}

</mosaic_0001>

<llo_original>
// kernel: tpu_custom_call.1
$region0: #{tpu_custom_call.1}
  #allocation0 [shape = 'u32[]', space=smem, size = 0x4, offset = 0x4, fixed_abs, tag = 'smem constant byte address 0x4 - core index']
  #allocation1 [shape = 'u32[144,128]{1,0:T(1,128)}', space=vmem, size = 0x12000, scoped, tag = 'internal scratch']
  #allocation2 [shape = 'f32[16,32]{1,0:T(8,128)}', space=vmem, size = 0x2000, scoped, tag = 'scratch operand']
  #allocation3 [shape = 'f32[16,32]{1,0:T(8,128)}', space=vmem, size = 0x2000, scoped, tag = 'scratch operand']
  %s0 = inlined_call_operand.hbm [shape: f32[16,32], index: 0, kind: input, shape index: {}]
  %s1 = inlined_call_operand.hbm [shape: f32[1,1], index: 1, kind: output, shape index: {0}]
  %s2 = inlined_call_operand.hbm [shape: f32[1,1], index: 2, kind: output, shape index: {1}]
  %3 = xla_tuple %s1, %s2
  %s4 = sld [smem:[#allocation0]]
  $region34: #{tpu_custom_call.1} parent=0
    _
  %s6 = ssub.s32 1, %s4
  %s7 = scalar_select 0, %s6, %s4
  $region1: #{tpu_custom_call.1} parent=0
    #allocation4 [shape = 'u8[8192]{0}', space=vmem, size = 0x2000, scoped, tag = 'input window, operand 0, single buffered']
    #allocation5 [shape = 's32[1]{0}', space=sflag, size = 0x4, scoped, tag = 'scoped memory for tpu_custom_call.1']
    #allocation6 [shape = 's32[1]{0}', space=sflag, size = 0x4, scoped, tag = 'scoped memory for tpu_custom_call.1']
    #allocation7 [shape = 'u8[512]{0}', space=vmem, size = 0x400, scoped, tag = 'output window, operand 0, single buffered']
    #allocation8 [shape = 'u8[512]{0}', space=vmem, size = 0x400, scoped, tag = 'output window, operand 1, single buffered']
    #allocation9 [shape = 's32[1]{0}', space=sflag, size = 0x4, scoped, tag = 'scoped memory for tpu_custom_call.1']
    %8 = vsyncpa [#allocation5], 0
    %9 = vsyncpa [#allocation6], 0
    %10 = vsyncpa [#allocation9], 0
    // Predicated region
    $region2: #{tpu_custom_call.1} parent=1 // pred_check
      _
    $region3: #{tpu_custom_call.1} parent=1 // pred_check_branch
      %12 = sbr.rel (0) target = $region5
    $region4: #{tpu_custom_call.1} parent=1 // pred_region
      %s14 = ssub.s32 256, 256
      %15 = vsyncadd [#allocation5], %s14
      %s16 = sshll.u32 [#allocation4], 4
      %s17 = int_to_ptr.vmem [resolvable:$true] %s16
      %22 = dma.hbm_to_vmem [thread:$0]  %s0, 256, %s17, [#allocation5], 128, 128, 8
    $region5: #{tpu_custom_call.1} parent=1 // pred_fallthru
      _
    // Predicated region
    $region6: #{tpu_custom_call.1} parent=1 // pred_check
      _
    $region7: #{tpu_custom_call.1} parent=1 // pred_check_branch
      %24 = sbr.rel (0) target = $region9
    $region8: #{tpu_custom_call.1} parent=1 // pred_region
      %25 = dma.done [#allocation5], 256
    $region9: #{tpu_custom_call.1} parent=1 // pred_fallthru
      _
    %p26 = scmp.eq.s32.totalorder 0, 0
    // Predicated region
    $region10: #{tpu_custom_call.1} parent=1 // pred_check
      %p27 = pneg %p26
    $region11: #{tpu_custom_call.1} parent=1 // pred_check_branch
      %29 = sbr.rel (%p27) target = $region13
    $region12: #{tpu_custom_call.1} parent=1 // pred_region
      %vm30 = vcmask 261120
      %31 = vst.msk [vmem:[#allocation2] sm:$0xff] %vm30, inf
      %32 = vst.msk [vmem:[#allocation2 + $0x8] sm:$0xff] %vm30, inf
      %33 = vst.msk [vmem:[#allocation3] sm:$0xff] %vm30, -inf
      %34 = vst.msk [vmem:[#allocation3 + $0x8] sm:$0xff] %vm30, -inf
    $region13: #{tpu_custom_call.1} parent=1 // pred_fallthru
      _
    %v35 = vld [vmem:[#allocation4] sm:$0xff]
    %v36 = vld [vmem:[#allocation4 + $0x8] sm:$0xff]
    %v37 = vld [vmem:[#allocation2] sm:$0xff]
    %v38 = vld [vmem:[#allocation2 + $0x8] sm:$0xff]
    %v39 = vmin.f32 %v37, %v35
    %v40 = vmin.f32 %v38, %v36
    %vm41 = vcmask 261120
    %42 = vst.msk [vmem:[#allocation2] sm:$0xff] %vm41, %v39
    %43 = vst.msk [vmem:[#allocation2 + $0x8] sm:$0xff] %vm41, %v40
    %v44 = vld [vmem:[#allocation3] sm:$0xff]
    %v45 = vld [vmem:[#allocation3 + $0x8] sm:$0xff]
    %v46 = vmax.f32 %v44, %v35
    %v47 = vmax.f32 %v45, %v36
    %48 = vst.msk [vmem:[#allocation3] sm:$0xff] %vm41, %v46
    %49 = vst.msk [vmem:[#allocation3 + $0x8] sm:$0xff] %vm41, %v47
    // Predicated region
    $region14: #{tpu_custom_call.1} parent=1 // pred_check
      %p50 = pneg %p26
    $region15: #{tpu_custom_call.1} parent=1 // pred_check_branch
      %52 = sbr.rel (%p50) target = $region17
    $region16: #{tpu_custom_call.1} parent=1 // pred_region
      %v53 = vld [vmem:[#allocation2] sm:$0xff]
      %v54 = vld [vmem:[#allocation2 + $0x8] sm:$0xff]
      %v55 = vsel %vm41, %v53, inf
      %v56 = vsel %vm41, %v54, inf
      %v57 = vmin.f32 %v55, %v56
      %58 = vmin.xlane.f32.xlu0 %v57
      %v59 = vpop.xlane.xlu0 %58
      %v60 = vrot.slane %v59, 4
      %v61 = vmin.f32 %v59, %v60
      %v62 = vrot.slane %v61, 2
      %v63 = vmin.f32 %v61, %v62
      %v64 = vrot.slane %v63, 1
      %v65 = vmin.f32 %v63, %v64
      %s66 = vtos %v65
      %v67 = vstv %s66
      %vm68 = vcmask 0
      %69 = vst.msk [vmem:[#allocation7] sm:$0x1] %vm68, %v67
      %v70 = vld [vmem:[#allocation3] sm:$0xff]
      %v71 = vld [vmem:[#allocation3 + $0x8] sm:$0xff]
      %v72 = vsel %vm41, %v70, -inf
      %v73 = vsel %vm41, %v71, -inf
      %v74 = vmax.f32 %v72, %v73
      %75 = vmax.xlane.f32.xlu0 %v74
      %v76 = vpop.xlane.xlu0 %75
      %v77 = vrot.slane %v76, 4
      %v78 = vmax.f32 %v76, %v77
      %v79 = vrot.slane %v78, 2
      %v80 = vmax.f32 %v78, %v79
      %v81 = vrot.slane %v80, 1
      %v82 = vmax.f32 %v80, %v81
      %s83 = vtos %v82
      %v84 = vstv %s83
      %85 = vst.msk [vmem:[#allocation8] sm:$0x1] %vm68, %v84
    $region17: #{tpu_custom_call.1} parent=1 // pred_fallthru
      _
    // Predicated region
    $region18: #{tpu_custom_call.1} parent=1 // pred_check
      _
    $region19: #{tpu_custom_call.1} parent=1 // pred_check_branch
      %87 = sbr.rel (0) target = $region21
    $region20: #{tpu_custom_call.1} parent=1 // pred_region
      %s89 = ssub.s32 16, 16
      %90 = vsyncadd [#allocation6], %s89
      %s92 = sshll.u32 [#allocation7], 4
      %s93 = int_to_ptr.vmem [resolvable:$true] %s92
      %95 = dma.vmem_to_hbm [thread:$0]  %s93, 16, %s1, [#allocation6]
    $region21: #{tpu_custom_call.1} parent=1 // pred_fallthru
      _
    // Predicated region
    $region22: #{tpu_custom_call.1} parent=1 // pred_check
      _
    $region23: #{tpu_custom_call.1} parent=1 // pred_check_branch
      %97 = sbr.rel (0) target = $region25
    $region24: #{tpu_custom_call.1} parent=1 // pred_region
      %s99 = ssub.s32 16, 16
      %100 = vsyncadd [#allocation9], %s99
      %s102 = sshll.u32 [#allocation8], 4
      %s103 = int_to_ptr.vmem [resolvable:$true] %s102
      %105 = dma.vmem_to_hbm [thread:$0]  %s103, 16, %s2, [#allocation9]
    $region25: #{tpu_custom_call.1} parent=1 // pred_fallthru
      _
    // Predicated region
    $region26: #{tpu_custom_call.1} parent=1 // pred_check
      _
    $region27: #{tpu_custom_call.1} parent=1 // pred_check_branch
      %107 = sbr.rel (0) target = $region29
    $region28: #{tpu_custom_call.1} parent=1 // pred_region
      %108 = dma.done [#allocation6], 16
    $region29: #{tpu_custom_call.1} parent=1 // pred_fallthru
      _
    // Predicated region
    $region30: #{tpu_custom_call.1} parent=1 // pred_check
      _
    $region31: #{tpu_custom_call.1} parent=1 // pred_check_branch
      %110 = sbr.rel (0) target = $region33
    $region32: #{tpu_custom_call.1} parent=1 // pred_region
      %111 = dma.done [#allocation9], 16
    $region33: #{tpu_custom_call.1} parent=1 // pred_fallthru
      _
    %112 = vsyncpa [#allocation5], 1
    %113 = vsyncpa [#allocation6], 1
    %114 = vsyncpa [#allocation9], 1

</llo_original>
